<compile_context>
chip_gen: v7x
topology: tpu7x:2x2x1
jax: 0.10.0
libtpu: 0.0.40
codegen_flags: <defaults>
</compile_context>

<pallas_src>
import math
import functools

import jax
import jax.numpy as jnp
from jax.experimental import pallas as pl
from jax.experimental.pallas import tpu as pltpu


def _rup(v, m):
    return ((v + m - 1) // m) * m


# ---------------------------------------------------------------------------
# Pass 1: conv-as-matmul + per-channel sum / sum-of-squares accumulation.
# ---------------------------------------------------------------------------
def _conv_stats_kernel(patches_ref, w_ref, conv_ref, sum_ref, sumsq_ref):
    conv = jnp.dot(patches_ref[...], w_ref[...],
                   preferred_element_type=jnp.float32)        # (TM, Cp) f32
    conv_ref[...] = conv

    @pl.when(pl.program_id(0) == 0)
    def _():
        sum_ref[...] = jnp.zeros_like(sum_ref)
        sumsq_ref[...] = jnp.zeros_like(sumsq_ref)

    # Padded rows are exactly zero -> contribute nothing; no masking needed.
    sum_ref[...] += jnp.sum(conv, axis=0, keepdims=True)
    sumsq_ref[...] += jnp.sum(conv * conv, axis=0, keepdims=True)


# ---------------------------------------------------------------------------
# Pass 2: folded BN (scale/shift) + ReLU, in place over the conv buffer.
# ---------------------------------------------------------------------------
def _bn_relu_kernel(conv_ref, scale_ref, shift_ref, out_ref):
    out_ref[...] = jnp.maximum(
        conv_ref[...] * scale_ref[...] + shift_ref[...], 0.0)


def conv_bn_relu(x_nchw, weight, gamma, beta, *, stride=1, padding=0,
                 eps=1e-5, tile_rows=256, compute_dtype=jnp.float32):
    """ConvBnRelu forward. x_nchw: (N, Cin, H, W); weight: (Cout, Cin, kh, kw)."""
    N, Cin, H, W = x_nchw.shape
    Cout, Cin_w, kh, kw = weight.shape
    assert Cin == Cin_w

    # ---- glue: im2col in plain JAX ----
    # TODO(synk): longer term, eliminate the materialized im2col (grid over
    # output tiles with halo DMA + kh*kw accumulated dots) to avoid the
    # kh*kw-times-amplified HBM read traffic.
    x = jnp.transpose(x_nchw, (0, 2, 3, 1)).astype(jnp.float32)   # NHWC
    xp = jnp.pad(x, ((0, 0), (padding, padding), (padding, padding), (0, 0)))
    Ho = (H + 2 * padding - kh) // stride + 1
    Wo = (W + 2 * padding - kw) // stride + 1
    cols = []
    for i in range(kh):
        for j in range(kw):
            cols.append(xp[:, i:i + stride * Ho:stride, j:j + stride * Wo:stride, :])
    patches = jnp.stack(cols, axis=3)                  # (N, Ho, Wo, kh*kw, Cin)
    patches = jnp.transpose(patches, (0, 1, 2, 4, 3))  # (N, Ho, Wo, Cin, kh*kw)
    R = N * Ho * Wo
    K = Cin * kh * kw
    patches = patches.reshape(R, K)
    w2d = weight.reshape(Cout, K).T.astype(jnp.float32)           # (K, Cout)

    # Padding: rows to the row tile; K only to sublane x8 (not x128); Cout to
    # x128 so output stores are lane-dense and unmasked.
    TM = min(tile_rows, _rup(R, 8))
    Rp = _rup(R, TM)
    Kp = _rup(K, 8)
    Cp = _rup(Cout, 128)
    n_tiles = Rp // TM

    patches_p = jnp.zeros((Rp, Kp), compute_dtype).at[:R, :K].set(
        patches.astype(compute_dtype))
    w_p = jnp.zeros((Kp, Cp), compute_dtype).at[:K, :Cout].set(
        w2d.astype(compute_dtype))

    # ---- pass 1: tiled conv + per-channel sum / sum-of-squares ----
    conv_p, sums, sumsq = pl.pallas_call(
        _conv_stats_kernel,
        out_shape=(
            jax.ShapeDtypeStruct((Rp, Cp), jnp.float32),
            jax.ShapeDtypeStruct((1, Cp), jnp.float32),
            jax.ShapeDtypeStruct((1, Cp), jnp.float32),
        ),
        grid=(n_tiles,),
        in_specs=[
            pl.BlockSpec((TM, Kp), lambda i: (i, 0)),
            pl.BlockSpec((Kp, Cp), lambda i: (0, 0)),
        ],
        out_specs=(
            pl.BlockSpec((TM, Cp), lambda i: (i, 0)),
            pl.BlockSpec((1, Cp), lambda i: (0, 0)),
            pl.BlockSpec((1, Cp), lambda i: (0, 0)),
        ),
        compiler_params=pltpu.CompilerParams(
            dimension_semantics=("arbitrary",),        # stats accumulate across tiles
            vmem_limit_bytes=48 * 1024 * 1024),        # explicit, fits v7x's 64 MiB
    )(patches_p, w_p)

    # ---- tiny glue (f32): fold BN into per-channel scale / shift ----
    cnt = jnp.float32(R)
    mean = sums / cnt                                   # (1, Cp)
    var = jnp.maximum(sumsq / cnt - mean * mean, 0.0)   # biased var, clamp cancellation
    gamma_p = jnp.ones((1, Cp), jnp.float32).at[0, :Cout].set(gamma.astype(jnp.float32))
    beta_p = jnp.zeros((1, Cp), jnp.float32).at[0, :Cout].set(beta.astype(jnp.float32))
    scale = gamma_p * jax.lax.rsqrt(var + eps)
    shift = beta_p - mean * scale

    # ---- pass 2: normalize + ReLU (in place over the conv buffer) ----
    out_p = pl.pallas_call(
        _bn_relu_kernel,
        out_shape=jax.ShapeDtypeStruct((Rp, Cp), jnp.float32),
        grid=(n_tiles,),
        in_specs=[
            pl.BlockSpec((TM, Cp), lambda i: (i, 0)),
            pl.BlockSpec((1, Cp), lambda i: (0, 0)),
            pl.BlockSpec((1, Cp), lambda i: (0, 0)),
        ],
        out_specs=pl.BlockSpec((TM, Cp), lambda i: (i, 0)),
        input_output_aliases={0: 0},
        compiler_params=pltpu.CompilerParams(
            dimension_semantics=("parallel",),          # both TCs on v7x
            vmem_limit_bytes=48 * 1024 * 1024),
    )(conv_p, scale, shift)

    out = out_p[:R, :Cout].reshape(N, Ho, Wo, Cout)
    return jnp.transpose(out, (0, 3, 1, 2))             # back to NCHW


def init_params(key, in_channels, out_channels, kernel_size):
    """Deterministic init matching ConvBnRelu.reset_parameters()."""
    fan_in = kernel_size * kernel_size * in_channels
    std = math.sqrt(1.0 / fan_in)
    # TODO(synk): PyTorch's truncated_normal_ keeps an out-of-range draw if all 4
    # resamples fail; jax.random.truncated_normal is the clean hard-truncated analog.
    w = std * jax.random.truncated_normal(
        key, -2.0, 2.0,
        (out_channels, in_channels, kernel_size, kernel_size), jnp.float32)
    gamma = jnp.ones((out_channels,), jnp.float32)
    beta = jnp.zeros((out_channels,), jnp.float32)
    return w, gamma, beta


if __name__ == "__main__":
    key = jax.random.PRNGKey(0)
    kx, kparam = jax.random.split(key)

    N, Cin, H, W = 2, 4, 16, 16
    Cout, ksize, stride, pad = 8, 3, 1, 1
    eps = 1e-5

    x = jax.random.normal(kx, (N, Cin, H, W), jnp.float32)
    w, gamma, beta = init_params(kparam, Cin, Cout, ksize)

    fwd = jax.jit(functools.partial(conv_bn_relu, stride=stride, padding=pad, eps=eps))
    out = jax.block_until_ready(fwd(x, w, gamma, beta))

    # Reference (pure JAX) for correctness sanity check.
    ref_conv = jax.lax.conv_general_dilated(
        x, w, (stride, stride), [(pad, pad), (pad, pad)],
        dimension_numbers=("NCHW", "OIHW", "NCHW"))
    mu = ref_conv.mean(axis=(0, 2, 3), keepdims=True)
    var = ref_conv.var(axis=(0, 2, 3), keepdims=True)  # biased, like BN train mode
    ref = (ref_conv - mu) / jnp.sqrt(var + eps)
    ref = ref * gamma.reshape(1, -1, 1, 1) + beta.reshape(1, -1, 1, 1)
    ref = jnp.maximum(ref, 0.0)

    assert out.shape == (N, Cout, H, W)
    assert jnp.allclose(out, ref, atol=1e-4, rtol=1e-4)
    print("KERNEL_OK")
</pallas_src>

<mosaic_0001>
module attributes {stable_mosaic.version = 11 : i64} {
  func.func @_conv_stats_kernel(%arg0: i32, %arg1: memref<256x40xf32, #tpu.memory_space<vmem>>, %arg2: memref<40x128xf32, #tpu.memory_space<vmem>>, %arg3: memref<256x128xf32, #tpu.memory_space<vmem>>, %arg4: memref<1x128xf32, #tpu.memory_space<vmem>>, %arg5: memref<1x128xf32, #tpu.memory_space<vmem>>) attributes {dimension_semantics = [#tpu.dimension_semantics<arbitrary>], iteration_bounds = array<i64: 2>, scalar_prefetch = 0 : i64, scratch_operands = 0 : i64, tpu.core_type = #tpu.core_type<tc>, window_params = [{transform_indices = @transform_0, window_bounds = array<i64: 256, 40>}, {pipeline_mode = #tpu.pipeline_mode<synchronous>, transform_indices = @transform_1, window_bounds = array<i64: 40, 128>}, {transform_indices = @transform_2, window_bounds = array<i64: 256, 128>}, {pipeline_mode = #tpu.pipeline_mode<synchronous>, transform_indices = @transform_3, window_bounds = array<i64: 1, 128>}, {pipeline_mode = #tpu.pipeline_mode<synchronous>, transform_indices = @transform_4, window_bounds = array<i64: 1, 128>}]} {
    %c0 = arith.constant 0 : index
    %c0_0 = arith.constant 0 : index
    %0 = vector.load %arg1[%c0, %c0_0] : memref<256x40xf32, #tpu.memory_space<vmem>>, vector<256x40xf32>
    %c0_1 = arith.constant 0 : index
    %c0_2 = arith.constant 0 : index
    %1 = vector.load %arg2[%c0_1, %c0_2] : memref<40x128xf32, #tpu.memory_space<vmem>>, vector<40x128xf32>
    %cst = arith.constant dense<0.000000e+00> : vector<256x128xf32>
    %2 = tpu.matmul %0, %1, %cst {dimension_numbers = #tpu.dot_dimension_numbers<[1], [0], [0], [1], [0, 0, 1, 1], [], []>} : vector<256x40xf32>, vector<40x128xf32>, vector<256x128xf32> -> vector<256x128xf32>
    %c0_3 = arith.constant 0 : index
    %c0_4 = arith.constant 0 : index
    %3 = vector.load %arg3[%c0_3, %c0_4] : memref<256x128xf32, #tpu.memory_space<vmem>>, vector<256x128xf32>
    tpu.vector_store %arg3[%c0_3, %c0_4], %2 {strides = array<i32>} : memref<256x128xf32, #tpu.memory_space<vmem>>, vector<256x128xf32>,
    %c0_i32 = arith.constant 0 : i32
    %4 = arith.cmpi eq, %arg0, %c0_i32 : i32
    %5 = arith.extui %4 : i1 to i32
    %c0_i32_5 = arith.constant 0 : i32
    %6 = arith.cmpi ne, %5, %c0_i32_5 : i32
    scf.if %6 {
      %cst_16 = arith.constant 0.000000e+00 : f32
      %18 = vector.broadcast %cst_16 : f32 to vector<1x128xf32>
      %c0_17 = arith.constant 0 : index
      %c0_18 = arith.constant 0 : index
      %19 = vector.load %arg4[%c0_17, %c0_18] : memref<1x128xf32, #tpu.memory_space<vmem>>, vector<1x128xf32>
      tpu.vector_store %arg4[%c0_17, %c0_18], %18 {strides = array<i32>} : memref<1x128xf32, #tpu.memory_space<vmem>>, vector<1x128xf32>,
      %cst_19 = arith.constant 0.000000e+00 : f32
      %20 = vector.broadcast %cst_19 : f32 to vector<1x128xf32>
      %c0_20 = arith.constant 0 : index
      %c0_21 = arith.constant 0 : index
      %21 = vector.load %arg5[%c0_20, %c0_21] : memref<1x128xf32, #tpu.memory_space<vmem>>, vector<1x128xf32>
      tpu.vector_store %arg5[%c0_20, %c0_21], %20 {strides = array<i32>} : memref<1x128xf32, #tpu.memory_space<vmem>>, vector<1x128xf32>,
    } else {
    }
    %c0_6 = arith.constant 0 : index
    %c0_7 = arith.constant 0 : index
    %7 = vector.load %arg4[%c0_6, %c0_7] : memref<1x128xf32, #tpu.memory_space<vmem>>, vector<1x128xf32>
    %cst_8 = arith.constant dense<0.000000e+00> : vector<128xf32>
    %8 = vector.multi_reduction <add>, %2, %cst_8 [0] : vector<256x128xf32> to vector<128xf32>
    %9 = vector.shape_cast %8 : vector<128xf32> to vector<1x128xf32>
    %10 = arith.addf %7, %9 : vector<1x128xf32>
    %c0_9 = arith.constant 0 : index
    %c0_10 = arith.constant 0 : index
    %11 = vector.load %arg4[%c0_9, %c0_10] : memref<1x128xf32, #tpu.memory_space<vmem>>, vector<1x128xf32>
    tpu.vector_store %arg4[%c0_9, %c0_10], %10 {strides = array<i32>} : memref<1x128xf32, #tpu.memory_space<vmem>>, vector<1x128xf32>,
    %c0_11 = arith.constant 0 : index
    %c0_12 = arith.constant 0 : index
    %12 = vector.load %arg5[%c0_11, %c0_12] : memref<1x128xf32, #tpu.memory_space<vmem>>, vector<1x128xf32>
    %13 = arith.mulf %2, %2 : vector<256x128xf32>
    %cst_13 = arith.constant dense<0.000000e+00> : vector<128xf32>
    %14 = vector.multi_reduction <add>, %13, %cst_13 [0] : vector<256x128xf32> to vector<128xf32>
    %15 = vector.shape_cast %14 : vector<128xf32> to vector<1x128xf32>
    %16 = arith.addf %12, %15 : vector<1x128xf32>
    %c0_14 = arith.constant 0 : index
    %c0_15 = arith.constant 0 : index
    %17 = vector.load %arg5[%c0_14, %c0_15] : memref<1x128xf32, #tpu.memory_space<vmem>>, vector<1x128xf32>
    tpu.vector_store %arg5[%c0_14, %c0_15], %16 {strides = array<i32>} : memref<1x128xf32, #tpu.memory_space<vmem>>, vector<1x128xf32>,
    return
  }
  func.func @transform_0(%arg0: i32) -> (i32, i32) {
    %c0_i32 = arith.constant 0 : i32
    %c0_i32_0 = arith.constant 0 : i32
    return %arg0, %c0_i32 : i32, i32
  }
  func.func @transform_1(%arg0: i32) -> (i32, i32) {
    %c0_i32 = arith.constant 0 : i32
    %c0_i32_0 = arith.constant 0 : i32
    %c0_i32_1 = arith.constant 0 : i32
    return %c0_i32, %c0_i32_0 : i32, i32
  }
  func.func @transform_2(%arg0: i32) -> (i32, i32) {
    %c0_i32 = arith.constant 0 : i32
    %c0_i32_0 = arith.constant 0 : i32
    return %arg0, %c0_i32 : i32, i32
  }
  func.func @transform_3(%arg0: i32) -> (i32, i32) {
    %c0_i32 = arith.constant 0 : i32
    %c0_i32_0 = arith.constant 0 : i32
    %c0_i32_1 = arith.constant 0 : i32
    return %c0_i32, %c0_i32_0 : i32, i32
  }
  func.func @transform_4(%arg0: i32) -> (i32, i32) {
    %c0_i32 = arith.constant 0 : i32
    %c0_i32_0 = arith.constant 0 : i32
    %c0_i32_1 = arith.constant 0 : i32
    return %c0_i32, %c0_i32_0 : i32, i32
  }
}

module attributes {stable_mosaic.version = 11 : i64} {
  func.func @_bn_relu_kernel(%arg0: i32, %arg1: memref<256x128xf32, #tpu.memory_space<vmem>>, %arg2: memref<1x128xf32, #tpu.memory_space<vmem>>, %arg3: memref<1x128xf32, #tpu.memory_space<vmem>>, %arg4: memref<256x128xf32, #tpu.memory_space<vmem>>) attributes {dimension_semantics = [#tpu.dimension_semantics<parallel>], iteration_bounds = array<i64: 2>, scalar_prefetch = 0 : i64, scratch_operands = 0 : i64, tpu.core_type = #tpu.core_type<tc>, window_params = [{transform_indices = @transform_0, window_bounds = array<i64: 256, 128>}, {pipeline_mode = #tpu.pipeline_mode<synchronous>, transform_indices = @transform_1, window_bounds = array<i64: 1, 128>}, {pipeline_mode = #tpu.pipeline_mode<synchronous>, transform_indices = @transform_2, window_bounds = array<i64: 1, 128>}, {transform_indices = @transform_3, window_bounds = array<i64: 256, 128>}]} {
    %c0 = arith.constant 0 : index
    %c0_0 = arith.constant 0 : index
    %0 = vector.load %arg1[%c0, %c0_0] : memref<256x128xf32, #tpu.memory_space<vmem>>, vector<256x128xf32>
    %c0_1 = arith.constant 0 : index
    %c0_2 = arith.constant 0 : index
    %1 = vector.load %arg2[%c0_1, %c0_2] : memref<1x128xf32, #tpu.memory_space<vmem>>, vector<1x128xf32>
    %2 = vector.broadcast %1 : vector<1x128xf32> to vector<256x128xf32>
    %3 = arith.mulf %0, %2 : vector<256x128xf32>
    %c0_3 = arith.constant 0 : index
    %c0_4 = arith.constant 0 : index
    %4 = vector.load %arg3[%c0_3, %c0_4] : memref<1x128xf32, #tpu.memory_space<vmem>>, vector<1x128xf32>
    %5 = vector.broadcast %4 : vector<1x128xf32> to vector<256x128xf32>
    %6 = arith.addf %3, %5 : vector<256x128xf32>
    %cst = arith.constant 0.000000e+00 : f32
    %7 = vector.broadcast %cst : f32 to vector<256x128xf32>
    %8 = arith.maximumf %6, %7 : vector<256x128xf32>
    %c0_5 = arith.constant 0 : index
    %c0_6 = arith.constant 0 : index
    %9 = vector.load %arg4[%c0_5, %c0_6] : memref<256x128xf32, #tpu.memory_space<vmem>>, vector<256x128xf32>
    tpu.vector_store %arg4[%c0_5, %c0_6], %8 {strides = array<i32>} : memref<256x128xf32, #tpu.memory_space<vmem>>, vector<256x128xf32>,
    return
  }
  func.func @transform_0(%arg0: i32) -> (i32, i32) {
    %c0_i32 = arith.constant 0 : i32
    %c0_i32_0 = arith.constant 0 : i32
    return %arg0, %c0_i32 : i32, i32
  }
  func.func @transform_1(%arg0: i32) -> (i32, i32) {
    %c0_i32 = arith.constant 0 : i32
    %c0_i32_0 = arith.constant 0 : i32
    %c0_i32_1 = arith.constant 0 : i32
    return %c0_i32, %c0_i32_0 : i32, i32
  }
  func.func @transform_2(%arg0: i32) -> (i32, i32) {
    %c0_i32 = arith.constant 0 : i32
    %c0_i32_0 = arith.constant 0 : i32
    %c0_i32_1 = arith.constant 0 : i32
    return %c0_i32, %c0_i32_0 : i32, i32
  }
  func.func @transform_3(%arg0: i32) -> (i32, i32) {
    %c0_i32 = arith.constant 0 : i32
    %c0_i32_0 = arith.constant 0 : i32
    return %arg0, %c0_i32 : i32, i32
  }
}

</mosaic_0001>

<llo_original>
// kernel: conv_bn_relu.2
$region0: #{conv_bn_relu.2}
  #allocation0 [shape = 'u32[]', space=smem, size = 0x4, offset = 0x4, fixed_abs, tag = 'smem constant byte address 0x4 - core index']
  #allocation1 [shape = 'u32[144,128]{1,0:T(1,128)}', space=vmem, size = 0x12000, scoped, tag = 'internal scratch']
  %s0 = inlined_call_operand.vmem [shape: f32[512,40], index: 0, kind: input, shape index: {}]
  %s1 = inlined_call_operand.vmem [shape: f32[40,128], index: 1, kind: input, shape index: {}]
  %s2 = inlined_call_operand.vmem [shape: f32[512,128], index: 2, kind: output, shape index: {0}]
  %s3 = inlined_call_operand.vmem [shape: f32[1,128], index: 3, kind: output, shape index: {1}]
  %s4 = inlined_call_operand.vmem [shape: f32[1,128], index: 4, kind: output, shape index: {2}]
  %5 = xla_tuple %s2, %s3, %s4
  %s6 = sld [smem:[#allocation0]]
  $region61: #{conv_bn_relu.2} parent=0
    _
  %s8 = ssub.s32 1, %s6
  %s9 = scalar_select 0, %s8, %s6
  loop: start=0, step=1, limit=4
  $region2: #{conv_bn_relu.2} parent=0 // loop_pre_header
    _
  $region3: #{conv_bn_relu.2} parent=0 // loop_header
    %s11 = sphi 0, %s15
    %p12 = scmp.ge.s32.totalorder %s11, 4
    %s21 = sphi 0, %s23
    %s24 = sphi 0, %s21
    %s25 = sphi 0, %s24
    %s41 = sphi 0, %s25
    %s45 = sphi 0, %s45
    %s47 = sphi 0, %s45
    %s48 = sphi 0, %s47
    %s62 = sphi 0, %s48
    %s68 = sphi 0, %s70
    %s71 = sphi 0, %s68
    %s72 = sphi 0, %s71
    %s88 = sphi 0, %s72
    %s92 = sphi 0, %s92
    %s94 = sphi 0, %s92
    %s95 = sphi 0, %s94
    %s109 = sphi 0, %s95
    %s113 = sphi 0, %s113
    %s115 = sphi 0, %s113
    %s116 = sphi 0, %s115
    %s130 = sphi 0, %s116
  $region4: #{conv_bn_relu.2} parent=0 // loop_header_branch
    %14 = sbr.rel (%p12) target = $region8
  $region5: #{conv_bn_relu.2} parent=0 // loop_body
    %s16 = ssub.s32 %s11, 1
    %s17 = ssub.s32 %s11, 2
    %s18 = sadd.s32 %s11, 1
    %s19 = ssub.s32 %s11, %s18
    %p20 = scmp.eq.s32.totalorder %s19, 0
    %s22 = sadd.s32 %s21, 1
    %s23 = scalar_select %p20, %s21, %s22
    %p26 = pneg %p20
    %p27 = scmp.eq.s32.totalorder %s11, 1
    %p28 = por %p26, %p27
    %p29 = scmp.ne.s32.totalorder %s21, %s24
    %p30 = scmp.eq.s32.totalorder %s11, 0
    %p31 = por %p29, %p30
    %p32 = scmp.ne.s32.totalorder %s21, %s24
    %p33 = scmp.eq.s32.totalorder %s16, 1
    %p34 = por %p32, %p33
    %p35 = scmp.ne.s32.totalorder %s24, %s25
    %p36 = scmp.eq.s32.totalorder %s16, 0
    %p37 = por %p35, %p36
    %p38 = scmp.ne.s32.totalorder %s24, %s25
    %p39 = scmp.eq.s32.totalorder %s17, 1
    %p40 = por %p38, %p39
    %p42 = scmp.ne.s32.totalorder %s25, %s41
    %p43 = scmp.eq.s32.totalorder %s17, 0
    %p44 = por %p42, %p43
    %s46 = sadd.s32 %s45, 1
    %p49 = scmp.eq.s32.totalorder %s11, 1
    %p50 = scmp.ne.s32.totalorder %s45, %s47
    %p51 = scmp.eq.s32.totalorder %s11, 0
    %p52 = por %p50, %p51
    %p53 = scmp.ne.s32.totalorder %s45, %s47
    %p54 = scmp.eq.s32.totalorder %s16, 1
    %p55 = por %p53, %p54
    %p56 = scmp.ne.s32.totalorder %s47, %s48
    %p57 = scmp.eq.s32.totalorder %s16, 0
    %p58 = por %p56, %p57
    %p59 = scmp.ne.s32.totalorder %s47, %s48
    %p60 = scmp.eq.s32.totalorder %s17, 1
    %p61 = por %p59, %p60
    %p63 = scmp.ne.s32.totalorder %s48, %s62
    %p64 = scmp.eq.s32.totalorder %s17, 0
    %p65 = por %p63, %p64
    %s66 = ssub.s32 %s11, %s18
    %p67 = scmp.eq.s32.totalorder %s66, 0
    %s69 = sadd.s32 %s68, 1
    %s70 = scalar_select %p67, %s68, %s69
    %p73 = pneg %p67
    %p74 = scmp.eq.s32.totalorder %s11, 1
    %p75 = por %p73, %p74
    %p76 = scmp.ne.s32.totalorder %s68, %s71
    %p77 = scmp.eq.s32.totalorder %s11, 0
    %p78 = por %p76, %p77
    %p79 = scmp.ne.s32.totalorder %s68, %s71
    %p80 = scmp.eq.s32.totalorder %s16, 1
    %p81 = por %p79, %p80
    %p82 = scmp.ne.s32.totalorder %s71, %s72
    %p83 = scmp.eq.s32.totalorder %s16, 0
    %p84 = por %p82, %p83
    %p85 = scmp.ne.s32.totalorder %s71, %s72
    %p86 = scmp.eq.s32.totalorder %s17, 1
    %p87 = por %p85, %p86
    %p89 = scmp.ne.s32.totalorder %s72, %s88
    %p90 = scmp.eq.s32.totalorder %s17, 0
    %p91 = por %p89, %p90
    %s93 = sadd.s32 %s92, 1
    %p96 = scmp.eq.s32.totalorder %s11, 1
    %p97 = scmp.ne.s32.totalorder %s92, %s94
    %p98 = scmp.eq.s32.totalorder %s11, 0
    %p99 = por %p97, %p98
    %p100 = scmp.ne.s32.totalorder %s92, %s94
    %p101 = scmp.eq.s32.totalorder %s16, 1
    %p102 = por %p100, %p101
    %p103 = scmp.ne.s32.totalorder %s94, %s95
    %p104 = scmp.eq.s32.totalorder %s16, 0
    %p105 = por %p103, %p104
    %p106 = scmp.ne.s32.totalorder %s94, %s95
    %p107 = scmp.eq.s32.totalorder %s17, 1
    %p108 = por %p106, %p107
    %p110 = scmp.ne.s32.totalorder %s95, %s109
    %p111 = scmp.eq.s32.totalorder %s17, 0
    %p112 = por %p110, %p111
    %s114 = sadd.s32 %s113, 1
    %p117 = scmp.eq.s32.totalorder %s11, 1
    %p118 = scmp.ne.s32.totalorder %s113, %s115
    %p119 = scmp.eq.s32.totalorder %s11, 0
    %p120 = por %p118, %p119
    %p121 = scmp.ne.s32.totalorder %s113, %s115
    %p122 = scmp.eq.s32.totalorder %s16, 1
    %p123 = por %p121, %p122
    %p124 = scmp.ne.s32.totalorder %s115, %s116
    %p125 = scmp.eq.s32.totalorder %s16, 0
    %p126 = por %p124, %p125
    %p127 = scmp.ne.s32.totalorder %s115, %s116
    %p128 = scmp.eq.s32.totalorder %s17, 1
    %p129 = por %p127, %p128
    %p131 = scmp.ne.s32.totalorder %s116, %s130
    %p132 = scmp.eq.s32.totalorder %s17, 0
    %p133 = por %p131, %p132
    %p134 = scmp.le.s32.totalorder 1, %s11
    %p135 = scmp.lt.s32.totalorder %s11, 3
    %p136 = pnand %p134, %p135
    %p137 = pneg %p136
    // Predicated region
    $region9: #{conv_bn_relu.2} parent=5 // pred_check
      _
    $region10: #{conv_bn_relu.2} parent=5 // pred_check_branch
      %139 = sbr.rel (%p136) target = $region12
    $region11: #{conv_bn_relu.2} parent=5 // pred_region
      %s140 = ssub.s32 %s11, 1
      // Predicated region
      $region13: #{conv_bn_relu.2} parent=11 // pred_check
        %p141 = pneg %p58
      $region14: #{conv_bn_relu.2} parent=11 // pred_check_branch
        %143 = sbr.rel (%p141) target = $region16
      $region15: #{conv_bn_relu.2} parent=11 // pred_region
        _
      $region16: #{conv_bn_relu.2} parent=11 // pred_fallthru
        _
    $region12: #{conv_bn_relu.2} parent=5 // pred_fallthru
      _
    %p144 = scmp.lt.s32.totalorder %s11, 2
    // Predicated region
    $region17: #{conv_bn_relu.2} parent=5 // pred_check
      %p145 = pneg %p144
    $region18: #{conv_bn_relu.2} parent=5 // pred_check_branch
      %147 = sbr.rel (%p145) target = $region20
    $region19: #{conv_bn_relu.2} parent=5 // pred_region
      // Predicated region
      $region21: #{conv_bn_relu.2} parent=19 // pred_check
        %p148 = pneg %p31
      $region22: #{conv_bn_relu.2} parent=19 // pred_check_branch
        %150 = sbr.rel (%p148) target = $region24
      $region23: #{conv_bn_relu.2} parent=19 // pred_region
        %s151 = smul.u32 32, %s11
        %p152 = scmp.lt.s32.totalorder %s151, 63
        %s153 = scalar_select %p152, %s151, 63
        %s154 = smul.addr %s153, 8
        %s155 = scalar_lea.vmem %s0, %s154
        %s156 = smul.u32 32, %s11
      $region24: #{conv_bn_relu.2} parent=19 // pred_fallthru
        _
    $region20: #{conv_bn_relu.2} parent=5 // pred_fallthru
      _
    %p157 = scmp.le.s32.totalorder 1, %s11
    %p158 = scmp.lt.s32.totalorder %s11, 3
    %p159 = pnand %p157, %p158
    %p160 = pneg %p159
    // Predicated region
    $region25: #{conv_bn_relu.2} parent=5 // pred_check
      _
    $region26: #{conv_bn_relu.2} parent=5 // pred_check_branch
      %162 = sbr.rel (%p159) target = $region28
    $region27: #{conv_bn_relu.2} parent=5 // pred_region
      %s163 = ssub.s32 %s11, 1
      %s164 = smul.u32 32, %s16
      %p165 = scmp.lt.s32.totalorder %s164, 63
      %s166 = scalar_select %p165, %s164, 63
      %s167 = smul.addr %s166, 8
      %s168 = scalar_lea.vmem %s0, %s167
      %p169 = pneg %p37
      %p170 = pneg %p34
      %p171 = pneg %p58
      %p172 = pneg %p55
      %p173 = pneg %p84
      %p174 = pneg %p81
      %s175 = smul.u32 32, %s16
      %p176 = scmp.lt.s32.totalorder %s175, 63
      %s177 = scalar_select %p176, %s175, 63
      %s178 = smul.addr %s177, 8
      %s179 = scalar_lea.vmem %s2, %s178
      %p180 = pneg %p105
      %p181 = pneg %p102
      %p182 = pneg %p126
      %p183 = pneg %p123
      %s184 = smul.u32 32, %s16
      %p185 = scmp.lt.s32.totalorder %s184, 63
      %s186 = scalar_select %p185, %s184, 63
      %s187 = smul.addr %s186, 8
      %s188 = scalar_lea.vmem %s0, %s187
      %s189 = smul.u32 32, %s16
      %s190 = smul.u32 32, %s16
      %p191 = scmp.lt.s32.totalorder %s190, 63
      %s192 = scalar_select %p191, %s190, 63
      %s193 = smul.addr %s192, 8
      %s194 = scalar_lea.vmem %s2, %s193
      %s195 = smul.u32 32, %s16
      %v196 = vld [vmem:[%s188] sm:$0xff]
      %v197 = vld [vmem:[%s188 + $0x8] sm:$0xff]
      %v198 = vld [vmem:[%s188 + $0x10] sm:$0xff]
      %v199 = vld [vmem:[%s188 + $0x18] sm:$0xff]
      %v200 = vld [vmem:[%s188 + $0x20] sm:$0xff]
      %v201 = vld [vmem:[%s188 + $0x28] sm:$0xff]
      %v202 = vld [vmem:[%s188 + $0x30] sm:$0xff]
      %v203 = vld [vmem:[%s188 + $0x38] sm:$0xff]
      %v204 = vld [vmem:[%s188 + $0x40] sm:$0xff]
      %v205 = vld [vmem:[%s188 + $0x48] sm:$0xff]
      %v206 = vld [vmem:[%s188 + $0x50] sm:$0xff]
      %v207 = vld [vmem:[%s188 + $0x58] sm:$0xff]
      %v208 = vld [vmem:[%s188 + $0x60] sm:$0xff]
      %v209 = vld [vmem:[%s188 + $0x68] sm:$0xff]
      %v210 = vld [vmem:[%s188 + $0x70] sm:$0xff]
      %v211 = vld [vmem:[%s188 + $0x78] sm:$0xff]
      %v212 = vld [vmem:[%s188 + $0x80] sm:$0xff]
      %v213 = vld [vmem:[%s188 + $0x88] sm:$0xff]
      %v214 = vld [vmem:[%s188 + $0x90] sm:$0xff]
      %v215 = vld [vmem:[%s188 + $0x98] sm:$0xff]
      %v216 = vld [vmem:[%s188 + $0xa0] sm:$0xff]
      %v217 = vld [vmem:[%s188 + $0xa8] sm:$0xff]
      %v218 = vld [vmem:[%s188 + $0xb0] sm:$0xff]
      %v219 = vld [vmem:[%s188 + $0xb8] sm:$0xff]
      %v220 = vld [vmem:[%s188 + $0xc0] sm:$0xff]
      %v221 = vld [vmem:[%s188 + $0xc8] sm:$0xff]
      %v222 = vld [vmem:[%s188 + $0xd0] sm:$0xff]
      %v223 = vld [vmem:[%s188 + $0xd8] sm:$0xff]
      %v224 = vld [vmem:[%s188 + $0xe0] sm:$0xff]
      %v225 = vld [vmem:[%s188 + $0xe8] sm:$0xff]
      %v226 = vld [vmem:[%s188 + $0xf0] sm:$0xff]
      %v227 = vld [vmem:[%s188 + $0xf8] sm:$0xff]
      %v228 = vld [vmem:[%s1] sm:$0xff]
      %v229 = vld [vmem:[%s1 + $0x8] sm:$0xff]
      %v230 = vld [vmem:[%s1 + $0x10] sm:$0xff]
      %v231 = vld [vmem:[%s1 + $0x18] sm:$0xff]
      %v232 = vld [vmem:[%s1 + $0x20] sm:$0xff]
      %vm233 = vcmask 326656
      %v235 = vsel %vm233, %v196, 0
      %v238 = vsel %vm233, %v197, 0
      %v241 = vsel %vm233, %v198, 0
      %v244 = vsel %vm233, %v199, 0
      %v247 = vsel %vm233, %v200, 0
      %v250 = vsel %vm233, %v201, 0
      %v253 = vsel %vm233, %v202, 0
      %v256 = vsel %vm233, %v203, 0
      %v259 = vsel %vm233, %v204, 0
      %v262 = vsel %vm233, %v205, 0
      %v265 = vsel %vm233, %v206, 0
      %v268 = vsel %vm233, %v207, 0
      %v271 = vsel %vm233, %v208, 0
      %v274 = vsel %vm233, %v209, 0
      %v277 = vsel %vm233, %v210, 0
      %v280 = vsel %vm233, %v211, 0
      %v283 = vsel %vm233, %v212, 0
      %v286 = vsel %vm233, %v213, 0
      %v289 = vsel %vm233, %v214, 0
      %v292 = vsel %vm233, %v215, 0
      %v295 = vsel %vm233, %v216, 0
      %v298 = vsel %vm233, %v217, 0
      %v301 = vsel %vm233, %v218, 0
      %v304 = vsel %vm233, %v219, 0
      %v307 = vsel %vm233, %v220, 0
      %v310 = vsel %vm233, %v221, 0
      %v313 = vsel %vm233, %v222, 0
      %v316 = vsel %vm233, %v223, 0
      %v319 = vsel %vm233, %v224, 0
      %v322 = vsel %vm233, %v225, 0
      %v325 = vsel %vm233, %v226, 0
      %v328 = vsel %vm233, %v227, 0
      %330 = vmatprep.subr.mxu0 0.0
      %331 = vmatpush1.msra.mxu0 %v228
      %332 = vmatprep.subr.mxu0 0.0
      %333 = vmatpush1.msra.mxu0 %v229
      %334 = vmatprep.subr.mxu0 0.0
      %335 = vmatpush1.msra.mxu0 %v230
      %336 = vmatprep.subr.mxu0 0.0
      %337 = vmatpush1.msra.mxu0 %v231
      %338 = vmatprep.subr.mxu0 0.0
      %339 = vmatpush1.msra.mxu0 %v232
      %340 = vmatprep.subr.mxu0 0.0
      %341 = vmatpush1.msra.mxu0 0.0
      %342 = vmatprep.subr.mxu0 0.0
      %343 = vmatpush1.msra.mxu0 0.0
      %344 = vmatprep.subr.mxu0 0.0
      %345 = vmatpush1.msra.mxu0 0.0
      %346 = vmatprep.subr.mxu0 0.0
      %347 = vmatpush1.msra.mxu0 0.0
      %348 = vmatprep.subr.mxu0 0.0
      %349 = vmatpush1.msra.mxu0 0.0
      %350 = vmatprep.subr.mxu0 0.0
      %351 = vmatpush1.msra.mxu0 0.0
      %352 = vmatprep.subr.mxu0 0.0
      %353 = vmatpush1.msra.mxu0 0.0
      %354 = vmatprep.subr.mxu0 0.0
      %355 = vmatpush1.msra.mxu0 0.0
      %356 = vmatprep.subr.mxu0 0.0
      %357 = vmatpush1.msra.mxu0 0.0
      %358 = vmatprep.subr.mxu0 0.0
      %359 = vmatpush1.msra.mxu0 0.0
      %360 = vmatprep.subr.mxu0 0.0
      %361 = vmatpush1.msra.mxu0 0.0
      %362 = vmatprep.subr.mxu0 0.0
      %363 = vmatpush1.msra.mxu0 0.0
      %364 = vmatprep.subr.mxu0 0.0
      %365 = vmatpush1.msra.mxu0 0.0
      %366 = vmatprep.subr.mxu0 0.0
      %367 = vmatpush1.msra.mxu0 0.0
      %368 = vmatprep.subr.mxu0 0.0
      %369 = vmatpush1.msra.mxu0 0.0
      %370 = vmatprep.subr.mxu0 0.0
      %371 = vmatpush1.msra.mxu0 0.0
      %372 = vmatprep.subr.mxu0 0.0
      %373 = vmatpush1.msra.mxu0 0.0
      %374 = vmatprep.subr.mxu0 0.0
      %375 = vmatpush1.msra.mxu0 0.0
      %376 = vmatprep.subr.mxu0 0.0
      %377 = vmatpush1.msra.mxu0 0.0
      %378 = vmatprep.subr.mxu0 0.0
      %379 = vmatpush1.msra.mxu0 0.0
      %380 = vmatprep.subr.mxu0 0.0
      %381 = vmatpush1.msra.mxu0 0.0
      %382 = vmatprep.subr.mxu0 0.0
      %383 = vmatpush1.msra.mxu0 0.0
      %384 = vmatprep.subr.mxu0 0.0
      %385 = vmatpush1.msra.mxu0 0.0
      %386 = vmatprep.subr.mxu0 0.0
      %387 = vmatpush1.msra.mxu0 0.0
      %388 = vmatprep.subr.mxu0 0.0
      %389 = vmatpush1.msra.mxu0 0.0
      %390 = vmatprep.subr.mxu0 0.0
      %391 = vmatpush1.msra.mxu0 0.0
      %392 = vmatprep.subr.mxu0 0.0
      %393 = vmatpush1.msra.mxu0 0.0
      %394 = vmatprep.mubr.f32.mxu0 0.0
      %395 = vmatmul.mubr.f32.gmra.mrb[0].mxu0 %v235
      %v396 = vpop.f32.mrb[0].mxu0
      %v397 = vadd.f32 0.0, %v396
      %v398 = vpop.f32.mrb[0].mxu0
      %399 = vmatprep.mubr.f32.mxu0 0.0
      %400 = vmatmul.mubr.f32.gmra.mrb[0].mxu0 %v238
      %v401 = vpop.f32.mrb[0].mxu0
      %v402 = vadd.f32 0.0, %v401
      %v403 = vpop.f32.mrb[0].mxu0
      %404 = vmatprep.mubr.f32.mxu0 0.0
      %405 = vmatmul.mubr.f32.gmra.mrb[0].mxu0 %v241
      %v406 = vpop.f32.mrb[0].mxu0
      %v407 = vadd.f32 0.0, %v406
      %v408 = vpop.f32.mrb[0].mxu0
      %409 = vmatprep.mubr.f32.mxu0 0.0
      %410 = vmatmul.mubr.f32.gmra.mrb[0].mxu0 %v244
      %v411 = vpop.f32.mrb[0].mxu0
      %v412 = vadd.f32 0.0, %v411
      %v413 = vpop.f32.mrb[0].mxu0
      %414 = vmatprep.mubr.f32.mxu0 0.0
      %415 = vmatmul.mubr.f32.gmra.mrb[0].mxu0 %v247
      %v416 = vpop.f32.mrb[0].mxu0
      %v417 = vadd.f32 0.0, %v416
      %v418 = vpop.f32.mrb[0].mxu0
      %419 = vmatprep.mubr.f32.mxu0 0.0
      %420 = vmatmul.mubr.f32.gmra.mrb[0].mxu0 %v250
      %v421 = vpop.f32.mrb[0].mxu0
      %v422 = vadd.f32 0.0, %v421
      %v423 = vpop.f32.mrb[0].mxu0
      %424 = vmatprep.mubr.f32.mxu0 0.0
      %425 = vmatmul.mubr.f32.gmra.mrb[0].mxu0 %v253
      %v426 = vpop.f32.mrb[0].mxu0
      %v427 = vadd.f32 0.0, %v426
      %v428 = vpop.f32.mrb[0].mxu0
      %429 = vmatprep.mubr.f32.mxu0 0.0
      %430 = vmatmul.mubr.f32.gmra.mrb[0].mxu0 %v256
      %v431 = vpop.f32.mrb[0].mxu0
      %v432 = vadd.f32 0.0, %v431
      %v433 = vpop.f32.mrb[0].mxu0
      %434 = vmatprep.mubr.f32.mxu0 0.0
      %435 = vmatmul.mubr.f32.gmra.mrb[0].mxu0 %v259
      %v436 = vpop.f32.mrb[0].mxu0
      %v437 = vadd.f32 0.0, %v436
      %v438 = vpop.f32.mrb[0].mxu0
      %439 = vmatprep.mubr.f32.mxu0 0.0
      %440 = vmatmul.mubr.f32.gmra.mrb[0].mxu0 %v262
      %v441 = vpop.f32.mrb[0].mxu0
      %v442 = vadd.f32 0.0, %v441
      %v443 = vpop.f32.mrb[0].mxu0
      %444 = vmatprep.mubr.f32.mxu0 0.0
      %445 = vmatmul.mubr.f32.gmra.mrb[0].mxu0 %v265
      %v446 = vpop.f32.mrb[0].mxu0
      %v447 = vadd.f32 0.0, %v446
      %v448 = vpop.f32.mrb[0].mxu0
      %449 = vmatprep.mubr.f32.mxu0 0.0
      %450 = vmatmul.mubr.f32.gmra.mrb[0].mxu0 %v268
      %v451 = vpop.f32.mrb[0].mxu0
      %v452 = vadd.f32 0.0, %v451
      %v453 = vpop.f32.mrb[0].mxu0
      %454 = vmatprep.mubr.f32.mxu0 0.0
      %455 = vmatmul.mubr.f32.gmra.mrb[0].mxu0 %v271
      %v456 = vpop.f32.mrb[0].mxu0
      %v457 = vadd.f32 0.0, %v456
      %v458 = vpop.f32.mrb[0].mxu0
      %459 = vmatprep.mubr.f32.mxu0 0.0
      %460 = vmatmul.mubr.f32.gmra.mrb[0].mxu0 %v274
      %v461 = vpop.f32.mrb[0].mxu0
      %v462 = vadd.f32 0.0, %v461
      %v463 = vpop.f32.mrb[0].mxu0
      %464 = vmatprep.mubr.f32.mxu0 0.0
      %465 = vmatmul.mubr.f32.gmra.mrb[0].mxu0 %v277
      %v466 = vpop.f32.mrb[0].mxu0
      %v467 = vadd.f32 0.0, %v466
      %v468 = vpop.f32.mrb[0].mxu0
      %469 = vmatprep.mubr.f32.mxu0 0.0
      %470 = vmatmul.mubr.f32.gmra.mrb[0].mxu0 %v280
      %v471 = vpop.f32.mrb[0].mxu0
      %v472 = vadd.f32 0.0, %v471
      %v473 = vpop.f32.mrb[0].mxu0
      %474 = vmatprep.mubr.f32.mxu0 0.0
      %475 = vmatmul.mubr.f32.gmra.mrb[0].mxu0 %v283
      %v476 = vpop.f32.mrb[0].mxu0
      %v477 = vadd.f32 0.0, %v476
      %v478 = vpop.f32.mrb[0].mxu0
      %479 = vmatprep.mubr.f32.mxu0 0.0
      %480 = vmatmul.mubr.f32.gmra.mrb[0].mxu0 %v286
      %v481 = vpop.f32.mrb[0].mxu0
      %v482 = vadd.f32 0.0, %v481
      %v483 = vpop.f32.mrb[0].mxu0
      %484 = vmatprep.mubr.f32.mxu0 0.0
      %485 = vmatmul.mubr.f32.gmra.mrb[0].mxu0 %v289
      %v486 = vpop.f32.mrb[0].mxu0
      %v487 = vadd.f32 0.0, %v486
      %v488 = vpop.f32.mrb[0].mxu0
      %489 = vmatprep.mubr.f32.mxu0 0.0
      %490 = vmatmul.mubr.f32.gmra.mrb[0].mxu0 %v292
      %v491 = vpop.f32.mrb[0].mxu0
      %v492 = vadd.f32 0.0, %v491
      %v493 = vpop.f32.mrb[0].mxu0
      %494 = vmatprep.mubr.f32.mxu0 0.0
      %495 = vmatmul.mubr.f32.gmra.mrb[0].mxu0 %v295
      %v496 = vpop.f32.mrb[0].mxu0
      %v497 = vadd.f32 0.0, %v496
      %v498 = vpop.f32.mrb[0].mxu0
      %499 = vmatprep.mubr.f32.mxu0 0.0
      %500 = vmatmul.mubr.f32.gmra.mrb[0].mxu0 %v298
      %v501 = vpop.f32.mrb[0].mxu0
      %v502 = vadd.f32 0.0, %v501
      %v503 = vpop.f32.mrb[0].mxu0
      %504 = vmatprep.mubr.f32.mxu0 0.0
      %505 = vmatmul.mubr.f32.gmra.mrb[0].mxu0 %v301
      %v506 = vpop.f32.mrb[0].mxu0
      %v507 = vadd.f32 0.0, %v506
      %v508 = vpop.f32.mrb[0].mxu0
      %509 = vmatprep.mubr.f32.mxu0 0.0
      %510 = vmatmul.mubr.f32.gmra.mrb[0].mxu0 %v304
      %v511 = vpop.f32.mrb[0].mxu0
      %v512 = vadd.f32 0.0, %v511
      %v513 = vpop.f32.mrb[0].mxu0
      %514 = vmatprep.mubr.f32.mxu0 0.0
      %515 = vmatmul.mubr.f32.gmra.mrb[0].mxu0 %v307
      %v516 = vpop.f32.mrb[0].mxu0
      %v517 = vadd.f32 0.0, %v516
      %v518 = vpop.f32.mrb[0].mxu0
      %519 = vmatprep.mubr.f32.mxu0 0.0
      %520 = vmatmul.mubr.f32.gmra.mrb[0].mxu0 %v310
      %v521 = vpop.f32.mrb[0].mxu0
      %v522 = vadd.f32 0.0, %v521
      %v523 = vpop.f32.mrb[0].mxu0
      %524 = vmatprep.mubr.f32.mxu0 0.0
      %525 = vmatmul.mubr.f32.gmra.mrb[0].mxu0 %v313
      %v526 = vpop.f32.mrb[0].mxu0
      %v527 = vadd.f32 0.0, %v526
      %v528 = vpop.f32.mrb[0].mxu0
      %529 = vmatprep.mubr.f32.mxu0 0.0
      %530 = vmatmul.mubr.f32.gmra.mrb[0].mxu0 %v316
      %v531 = vpop.f32.mrb[0].mxu0
      %v532 = vadd.f32 0.0, %v531
      %v533 = vpop.f32.mrb[0].mxu0
      %534 = vmatprep.mubr.f32.mxu0 0.0
      %535 = vmatmul.mubr.f32.gmra.mrb[0].mxu0 %v319
      %v536 = vpop.f32.mrb[0].mxu0
      %v537 = vadd.f32 0.0, %v536
      %v538 = vpop.f32.mrb[0].mxu0
      %539 = vmatprep.mubr.f32.mxu0 0.0
      %540 = vmatmul.mubr.f32.gmra.mrb[0].mxu0 %v322
      %v541 = vpop.f32.mrb[0].mxu0
      %v542 = vadd.f32 0.0, %v541
      %v543 = vpop.f32.mrb[0].mxu0
      %544 = vmatprep.mubr.f32.mxu0 0.0
      %545 = vmatmul.mubr.f32.gmra.mrb[0].mxu0 %v325
      %v546 = vpop.f32.mrb[0].mxu0
      %v547 = vadd.f32 0.0, %v546
      %v548 = vpop.f32.mrb[0].mxu0
      %549 = vmatprep.mubr.f32.mxu0 0.0
      %550 = vmatmul.mubr.f32.gmra.mrb[0].mxu0 %v328
      %v551 = vpop.f32.mrb[0].mxu0
      %v552 = vadd.f32 0.0, %v551
      %v553 = vpop.f32.mrb[0].mxu0
      %554 = vdwg.mxu0
      %555 = vst [vmem:[%s194] sm:$0xff] %v397
      %556 = vst [vmem:[%s194 + $0x8] sm:$0xff] %v402
      %557 = vst [vmem:[%s194 + $0x10] sm:$0xff] %v407
      %558 = vst [vmem:[%s194 + $0x18] sm:$0xff] %v412
      %559 = vst [vmem:[%s194 + $0x20] sm:$0xff] %v417
      %560 = vst [vmem:[%s194 + $0x28] sm:$0xff] %v422
      %561 = vst [vmem:[%s194 + $0x30] sm:$0xff] %v427
      %562 = vst [vmem:[%s194 + $0x38] sm:$0xff] %v432
      %563 = vst [vmem:[%s194 + $0x40] sm:$0xff] %v437
      %564 = vst [vmem:[%s194 + $0x48] sm:$0xff] %v442
      %565 = vst [vmem:[%s194 + $0x50] sm:$0xff] %v447
      %566 = vst [vmem:[%s194 + $0x58] sm:$0xff] %v452
      %567 = vst [vmem:[%s194 + $0x60] sm:$0xff] %v457
      %568 = vst [vmem:[%s194 + $0x68] sm:$0xff] %v462
      %569 = vst [vmem:[%s194 + $0x70] sm:$0xff] %v467
      %570 = vst [vmem:[%s194 + $0x78] sm:$0xff] %v472
      %571 = vst [vmem:[%s194 + $0x80] sm:$0xff] %v477
      %572 = vst [vmem:[%s194 + $0x88] sm:$0xff] %v482
      %573 = vst [vmem:[%s194 + $0x90] sm:$0xff] %v487
      %574 = vst [vmem:[%s194 + $0x98] sm:$0xff] %v492
      %575 = vst [vmem:[%s194 + $0xa0] sm:$0xff] %v497
      %576 = vst [vmem:[%s194 + $0xa8] sm:$0xff] %v502
      %577 = vst [vmem:[%s194 + $0xb0] sm:$0xff] %v507
      %578 = vst [vmem:[%s194 + $0xb8] sm:$0xff] %v512
      %579 = vst [vmem:[%s194 + $0xc0] sm:$0xff] %v517
      %580 = vst [vmem:[%s194 + $0xc8] sm:$0xff] %v522
      %581 = vst [vmem:[%s194 + $0xd0] sm:$0xff] %v527
      %582 = vst [vmem:[%s194 + $0xd8] sm:$0xff] %v532
      %583 = vst [vmem:[%s194 + $0xe0] sm:$0xff] %v537
      %584 = vst [vmem:[%s194 + $0xe8] sm:$0xff] %v542
      %585 = vst [vmem:[%s194 + $0xf0] sm:$0xff] %v547
      %586 = vst [vmem:[%s194 + $0xf8] sm:$0xff] %v552
      %p587 = scmp.eq.s32.totalorder %s16, 0
      // Predicated region
      $region29: #{conv_bn_relu.2} parent=27 // pred_check
        %p588 = pneg %p587
      $region30: #{conv_bn_relu.2} parent=27 // pred_check_branch
        %590 = sbr.rel (%p588) target = $region32
      $region31: #{conv_bn_relu.2} parent=27 // pred_region
        %591 = vst [vmem:[%s3] sm:$0x1] 0.0
        %592 = vst [vmem:[%s4] sm:$0x1] 0.0
      $region32: #{conv_bn_relu.2} parent=27 // pred_fallthru
        _
      %v593 = vld [vmem:[%s3] sm:$0x1]
      %v594 = vadd.f32 %v397, %v402
      %v595 = vadd.f32 %v594, %v407
      %v596 = vadd.f32 %v595, %v412
      %v597 = vadd.f32 %v596, %v417
      %v598 = vadd.f32 %v597, %v422
      %v599 = vadd.f32 %v598, %v427
      %v600 = vadd.f32 %v599, %v432
      %v601 = vadd.f32 %v600, %v437
      %v602 = vadd.f32 %v601, %v442
      %v603 = vadd.f32 %v602, %v447
      %v604 = vadd.f32 %v603, %v452
      %v605 = vadd.f32 %v604, %v457
      %v606 = vadd.f32 %v605, %v462
      %v607 = vadd.f32 %v606, %v467
      %v608 = vadd.f32 %v607, %v472
      %v609 = vadd.f32 %v608, %v477
      %v610 = vadd.f32 %v609, %v482
      %v611 = vadd.f32 %v610, %v487
      %v612 = vadd.f32 %v611, %v492
      %v613 = vadd.f32 %v612, %v497
      %v614 = vadd.f32 %v613, %v502
      %v615 = vadd.f32 %v614, %v507
      %v616 = vadd.f32 %v615, %v512
      %v617 = vadd.f32 %v616, %v517
      %v618 = vadd.f32 %v617, %v522
      %v619 = vadd.f32 %v618, %v527
      %v620 = vadd.f32 %v619, %v532
      %v621 = vadd.f32 %v620, %v537
      %v622 = vadd.f32 %v621, %v542
      %v623 = vadd.f32 %v622, %v547
      %v624 = vadd.f32 %v623, %v552
      %v625 = vrot.slane %v624, 4
      %v626 = vadd.f32 %v624, %v625
      %v627 = vrot.slane %v626, 2
      %v628 = vadd.f32 %v626, %v627
      %v629 = vrot.slane %v628, 1
      %v630 = vadd.f32 %v628, %v629
      %v631 = vadd.f32 %v593, %v630
      %632 = vst [vmem:[%s3] sm:$0x1] %v631
      %v633 = vld [vmem:[%s4] sm:$0x1]
      %v634 = vmul.f32 %v397, %v397
      %v635 = vmul.f32 %v402, %v402
      %v636 = vmul.f32 %v407, %v407
      %v637 = vmul.f32 %v412, %v412
      %v638 = vmul.f32 %v417, %v417
      %v639 = vmul.f32 %v422, %v422
      %v640 = vmul.f32 %v427, %v427
      %v641 = vmul.f32 %v432, %v432
      %v642 = vmul.f32 %v437, %v437
      %v643 = vmul.f32 %v442, %v442
      %v644 = vmul.f32 %v447, %v447
      %v645 = vmul.f32 %v452, %v452
      %v646 = vmul.f32 %v457, %v457
      %v647 = vmul.f32 %v462, %v462
      %v648 = vmul.f32 %v467, %v467
      %v649 = vmul.f32 %v472, %v472
      %v650 = vmul.f32 %v477, %v477
      %v651 = vmul.f32 %v482, %v482
      %v652 = vmul.f32 %v487, %v487
      %v653 = vmul.f32 %v492, %v492
      %v654 = vmul.f32 %v497, %v497
      %v655 = vmul.f32 %v502, %v502
      %v656 = vmul.f32 %v507, %v507
      %v657 = vmul.f32 %v512, %v512
      %v658 = vmul.f32 %v517, %v517
      %v659 = vmul.f32 %v522, %v522
      %v660 = vmul.f32 %v527, %v527
      %v661 = vmul.f32 %v532, %v532
      %v662 = vmul.f32 %v537, %v537
      %v663 = vmul.f32 %v542, %v542
      %v664 = vmul.f32 %v547, %v547
      %v665 = vmul.f32 %v552, %v552
      %v666 = vadd.f32 %v634, %v635
      %v667 = vadd.f32 %v666, %v636
      %v668 = vadd.f32 %v667, %v637
      %v669 = vadd.f32 %v668, %v638
      %v670 = vadd.f32 %v669, %v639
      %v671 = vadd.f32 %v670, %v640
      %v672 = vadd.f32 %v671, %v641
      %v673 = vadd.f32 %v672, %v642
      %v674 = vadd.f32 %v673, %v643
      %v675 = vadd.f32 %v674, %v644
      %v676 = vadd.f32 %v675, %v645
      %v677 = vadd.f32 %v676, %v646
      %v678 = vadd.f32 %v677, %v647
      %v679 = vadd.f32 %v678, %v648
      %v680 = vadd.f32 %v679, %v649
      %v681 = vadd.f32 %v680, %v650
      %v682 = vadd.f32 %v681, %v651
      %v683 = vadd.f32 %v682, %v652
      %v684 = vadd.f32 %v683, %v653
      %v685 = vadd.f32 %v684, %v654
      %v686 = vadd.f32 %v685, %v655
      %v687 = vadd.f32 %v686, %v656
      %v688 = vadd.f32 %v687, %v657
      %v689 = vadd.f32 %v688, %v658
      %v690 = vadd.f32 %v689, %v659
      %v691 = vadd.f32 %v690, %v660
      %v692 = vadd.f32 %v691, %v661
      %v693 = vadd.f32 %v692, %v662
      %v694 = vadd.f32 %v693, %v663
      %v695 = vadd.f32 %v694, %v664
      %v696 = vadd.f32 %v695, %v665
      %v697 = vrot.slane %v696, 4
      %v698 = vadd.f32 %v696, %v697
      %v699 = vrot.slane %v698, 2
      %v700 = vadd.f32 %v698, %v699
      %v701 = vrot.slane %v700, 1
      %v702 = vadd.f32 %v700, %v701
      %v703 = vadd.f32 %v633, %v702
      %704 = vst [vmem:[%s4] sm:$0x1] %v703
      %s705 = smul.u32 32, %s16
      %p706 = scmp.lt.s32.totalorder %s705, 63
      %s707 = scalar_select %p706, %s705, 63
      %s708 = smul.addr %s707, 8
      %s709 = scalar_lea.vmem %s2, %s708
      // Predicated region
      $region33: #{conv_bn_relu.2} parent=27 // pred_check
        %p710 = pneg %p81
      $region34: #{conv_bn_relu.2} parent=27 // pred_check_branch
        %712 = sbr.rel (%p710) target = $region36
      $region35: #{conv_bn_relu.2} parent=27 // pred_region
        %s713 = smul.u32 32, %s16
      $region36: #{conv_bn_relu.2} parent=27 // pred_fallthru
        _
      // Predicated region
      $region37: #{conv_bn_relu.2} parent=27 // pred_check
        %p714 = pneg %p102
      $region38: #{conv_bn_relu.2} parent=27 // pred_check_branch
        %716 = sbr.rel (%p714) target = $region40
      $region39: #{conv_bn_relu.2} parent=27 // pred_region
        _
      $region40: #{conv_bn_relu.2} parent=27 // pred_fallthru
        _
      // Predicated region
      $region41: #{conv_bn_relu.2} parent=27 // pred_check
        %p717 = pneg %p123
      $region42: #{conv_bn_relu.2} parent=27 // pred_check_branch
        %719 = sbr.rel (%p717) target = $region44
      $region43: #{conv_bn_relu.2} parent=27 // pred_region
        _
      $region44: #{conv_bn_relu.2} parent=27 // pred_fallthru
        _
      // Predicated region
      $region45: #{conv_bn_relu.2} parent=27 // pred_check
        %p720 = pneg %p102
      $region46: #{conv_bn_relu.2} parent=27 // pred_check_branch
        %722 = sbr.rel (%p720) target = $region48
      $region47: #{conv_bn_relu.2} parent=27 // pred_region
        _
      $region48: #{conv_bn_relu.2} parent=27 // pred_fallthru
        _
      // Predicated region
      $region49: #{conv_bn_relu.2} parent=27 // pred_check
        %p723 = pneg %p123
      $region50: #{conv_bn_relu.2} parent=27 // pred_check_branch
        %725 = sbr.rel (%p723) target = $region52
      $region51: #{conv_bn_relu.2} parent=27 // pred_region
        _
      $region52: #{conv_bn_relu.2} parent=27 // pred_fallthru
        _
    $region28: #{conv_bn_relu.2} parent=5 // pred_fallthru
      _
    %p726 = scmp.le.s32.totalorder 2, %s11
    // Predicated region
    $region53: #{conv_bn_relu.2} parent=5 // pred_check
      %p727 = pneg %p726
    $region54: #{conv_bn_relu.2} parent=5 // pred_check_branch
      %729 = sbr.rel (%p727) target = $region56
    $region55: #{conv_bn_relu.2} parent=5 // pred_region
      %s730 = ssub.s32 %s11, 2
      // Predicated region
      $region57: #{conv_bn_relu.2} parent=55 // pred_check
        %p731 = pneg %p87
      $region58: #{conv_bn_relu.2} parent=55 // pred_check_branch
        %733 = sbr.rel (%p731) target = $region60
      $region59: #{conv_bn_relu.2} parent=55 // pred_region
        %s734 = smul.u32 32, %s17
        %p735 = scmp.lt.s32.totalorder %s734, 63
        %s736 = scalar_select %p735, %s734, 63
        %s737 = smul.addr %s736, 8
        %s738 = scalar_lea.vmem %s2, %s737
      $region60: #{conv_bn_relu.2} parent=55 // pred_fallthru
        _
    $region56: #{conv_bn_relu.2} parent=5 // pred_fallthru
      _
  $region6: #{conv_bn_relu.2} parent=0 // loop_footer
    %s15 = sadd.s32 1, %s11
  $region7: #{conv_bn_relu.2} parent=0 // loop_footer_branch
    %10 = sbr.rel target = $region3
  $region8: #{conv_bn_relu.2} parent=0 // loop_exit
    _

// kernel: conv_bn_relu.3
$region0: #{conv_bn_relu.3}
  #allocation0 [shape = 'u32[]', space=smem, size = 0x4, offset = 0x4, fixed_abs, tag = 'smem constant byte address 0x4 - core index']
  #allocation1 [shape = 'u32[144,128]{1,0:T(1,128)}', space=vmem, size = 0x12000, scoped, tag = 'internal scratch']
  %s0 = inlined_call_operand.vmem [shape: f32[512,128], index: 0, kind: input, shape index: {}, may-alias: {0,3}]
  %s1 = inlined_call_operand.vmem [shape: f32[1,128], index: 1, kind: input, shape index: {}]
  %s2 = inlined_call_operand.vmem [shape: f32[1,128], index: 2, kind: input, shape index: {}]
  %s3 = inlined_call_operand.vmem [shape: f32[512,128], index: 3, kind: output, shape index: {}, may-alias: {0,3}]
  %s4 = sld [smem:[#allocation0]]
  $region45: #{conv_bn_relu.3} parent=0
    _
  %s6 = ssub.s32 1, %s4
  %s7 = scalar_select 0, %s6, %s4
  loop: start=0, step=1, limit=4
  $region2: #{conv_bn_relu.3} parent=0 // loop_pre_header
    _
  $region3: #{conv_bn_relu.3} parent=0 // loop_header
    %s9 = sphi 0, %s13
    %p10 = scmp.ge.s32.totalorder %s9, 4
    %s19 = sphi 0, %s21
    %s22 = sphi 0, %s19
    %s23 = sphi 0, %s22
    %s39 = sphi 0, %s23
    %s43 = sphi 0, %s43
    %s45 = sphi 0, %s43
    %s46 = sphi 0, %s45
    %s60 = sphi 0, %s46
    %s64 = sphi 0, %s64
    %s66 = sphi 0, %s64
    %s67 = sphi 0, %s66
    %s81 = sphi 0, %s67
    %s87 = sphi 0, %s89
    %s90 = sphi 0, %s87
    %s91 = sphi 0, %s90
    %s107 = sphi 0, %s91
  $region4: #{conv_bn_relu.3} parent=0 // loop_header_branch
    %12 = sbr.rel (%p10) target = $region8
  $region5: #{conv_bn_relu.3} parent=0 // loop_body
    %s14 = ssub.s32 %s9, 1
    %s15 = ssub.s32 %s9, 2
    %s16 = sadd.s32 %s9, 1
    %s17 = ssub.s32 %s9, %s16
    %p18 = scmp.eq.s32.totalorder %s17, 0
    %s20 = sadd.s32 %s19, 1
    %s21 = scalar_select %p18, %s19, %s20
    %p24 = pneg %p18
    %p25 = scmp.eq.s32.totalorder %s9, 1
    %p26 = por %p24, %p25
    %p27 = scmp.ne.s32.totalorder %s19, %s22
    %p28 = scmp.eq.s32.totalorder %s9, 0
    %p29 = por %p27, %p28
    %p30 = scmp.ne.s32.totalorder %s19, %s22
    %p31 = scmp.eq.s32.totalorder %s14, 1
    %p32 = por %p30, %p31
    %p33 = scmp.ne.s32.totalorder %s22, %s23
    %p34 = scmp.eq.s32.totalorder %s14, 0
    %p35 = por %p33, %p34
    %p36 = scmp.ne.s32.totalorder %s22, %s23
    %p37 = scmp.eq.s32.totalorder %s15, 1
    %p38 = por %p36, %p37
    %p40 = scmp.ne.s32.totalorder %s23, %s39
    %p41 = scmp.eq.s32.totalorder %s15, 0
    %p42 = por %p40, %p41
    %s44 = sadd.s32 %s43, 1
    %p47 = scmp.eq.s32.totalorder %s9, 1
    %p48 = scmp.ne.s32.totalorder %s43, %s45
    %p49 = scmp.eq.s32.totalorder %s9, 0
    %p50 = por %p48, %p49
    %p51 = scmp.ne.s32.totalorder %s43, %s45
    %p52 = scmp.eq.s32.totalorder %s14, 1
    %p53 = por %p51, %p52
    %p54 = scmp.ne.s32.totalorder %s45, %s46
    %p55 = scmp.eq.s32.totalorder %s14, 0
    %p56 = por %p54, %p55
    %p57 = scmp.ne.s32.totalorder %s45, %s46
    %p58 = scmp.eq.s32.totalorder %s15, 1
    %p59 = por %p57, %p58
    %p61 = scmp.ne.s32.totalorder %s46, %s60
    %p62 = scmp.eq.s32.totalorder %s15, 0
    %p63 = por %p61, %p62
    %s65 = sadd.s32 %s64, 1
    %p68 = scmp.eq.s32.totalorder %s9, 1
    %p69 = scmp.ne.s32.totalorder %s64, %s66
    %p70 = scmp.eq.s32.totalorder %s9, 0
    %p71 = por %p69, %p70
    %p72 = scmp.ne.s32.totalorder %s64, %s66
    %p73 = scmp.eq.s32.totalorder %s14, 1
    %p74 = por %p72, %p73
    %p75 = scmp.ne.s32.totalorder %s66, %s67
    %p76 = scmp.eq.s32.totalorder %s14, 0
    %p77 = por %p75, %p76
    %p78 = scmp.ne.s32.totalorder %s66, %s67
    %p79 = scmp.eq.s32.totalorder %s15, 1
    %p80 = por %p78, %p79
    %p82 = scmp.ne.s32.totalorder %s67, %s81
    %p83 = scmp.eq.s32.totalorder %s15, 0
    %p84 = por %p82, %p83
    %s85 = ssub.s32 %s9, %s16
    %p86 = scmp.eq.s32.totalorder %s85, 0
    %s88 = sadd.s32 %s87, 1
    %s89 = scalar_select %p86, %s87, %s88
    %p92 = pneg %p86
    %p93 = scmp.eq.s32.totalorder %s9, 1
    %p94 = por %p92, %p93
    %p95 = scmp.ne.s32.totalorder %s87, %s90
    %p96 = scmp.eq.s32.totalorder %s9, 0
    %p97 = por %p95, %p96
    %p98 = scmp.ne.s32.totalorder %s87, %s90
    %p99 = scmp.eq.s32.totalorder %s14, 1
    %p100 = por %p98, %p99
    %p101 = scmp.ne.s32.totalorder %s90, %s91
    %p102 = scmp.eq.s32.totalorder %s14, 0
    %p103 = por %p101, %p102
    %p104 = scmp.ne.s32.totalorder %s90, %s91
    %p105 = scmp.eq.s32.totalorder %s15, 1
    %p106 = por %p104, %p105
    %p108 = scmp.ne.s32.totalorder %s91, %s107
    %p109 = scmp.eq.s32.totalorder %s15, 0
    %p110 = por %p108, %p109
    %p111 = scmp.le.s32.totalorder 1, %s9
    %p112 = scmp.lt.s32.totalorder %s9, 3
    %p113 = pnand %p111, %p112
    %p114 = pneg %p113
    // Predicated region
    $region9: #{conv_bn_relu.3} parent=5 // pred_check
      _
    $region10: #{conv_bn_relu.3} parent=5 // pred_check_branch
      %116 = sbr.rel (%p113) target = $region12
    $region11: #{conv_bn_relu.3} parent=5 // pred_region
      %s117 = ssub.s32 %s9, 1
      // Predicated region
      $region13: #{conv_bn_relu.3} parent=11 // pred_check
        %p118 = pneg %p56
      $region14: #{conv_bn_relu.3} parent=11 // pred_check_branch
        %120 = sbr.rel (%p118) target = $region16
      $region15: #{conv_bn_relu.3} parent=11 // pred_region
        _
      $region16: #{conv_bn_relu.3} parent=11 // pred_fallthru
        _
      // Predicated region
      $region17: #{conv_bn_relu.3} parent=11 // pred_check
        %p121 = pneg %p77
      $region18: #{conv_bn_relu.3} parent=11 // pred_check_branch
        %123 = sbr.rel (%p121) target = $region20
      $region19: #{conv_bn_relu.3} parent=11 // pred_region
        _
      $region20: #{conv_bn_relu.3} parent=11 // pred_fallthru
        _
    $region12: #{conv_bn_relu.3} parent=5 // pred_fallthru
      _
    %p124 = scmp.lt.s32.totalorder %s9, 2
    // Predicated region
    $region21: #{conv_bn_relu.3} parent=5 // pred_check
      %p125 = pneg %p124
    $region22: #{conv_bn_relu.3} parent=5 // pred_check_branch
      %127 = sbr.rel (%p125) target = $region24
    $region23: #{conv_bn_relu.3} parent=5 // pred_region
      // Predicated region
      $region25: #{conv_bn_relu.3} parent=23 // pred_check
        %p128 = pneg %p29
      $region26: #{conv_bn_relu.3} parent=23 // pred_check_branch
        %130 = sbr.rel (%p128) target = $region28
      $region27: #{conv_bn_relu.3} parent=23 // pred_region
        %s131 = smul.u32 32, %s9
        %p132 = scmp.lt.s32.totalorder %s131, 63
        %s133 = scalar_select %p132, %s131, 63
        %s134 = smul.addr %s133, 8
        %s135 = scalar_lea.vmem %s0, %s134
        %s136 = smul.u32 32, %s9
      $region28: #{conv_bn_relu.3} parent=23 // pred_fallthru
        _
    $region24: #{conv_bn_relu.3} parent=5 // pred_fallthru
      _
    %p137 = scmp.le.s32.totalorder 1, %s9
    %p138 = scmp.lt.s32.totalorder %s9, 3
    %p139 = pnand %p137, %p138
    %p140 = pneg %p139
    // Predicated region
    $region29: #{conv_bn_relu.3} parent=5 // pred_check
      _
    $region30: #{conv_bn_relu.3} parent=5 // pred_check_branch
      %142 = sbr.rel (%p139) target = $region32
    $region31: #{conv_bn_relu.3} parent=5 // pred_region
      %s143 = ssub.s32 %s9, 1
      %s144 = smul.u32 32, %s14
      %p145 = scmp.lt.s32.totalorder %s144, 63
      %s146 = scalar_select %p145, %s144, 63
      %s147 = smul.addr %s146, 8
      %s148 = scalar_lea.vmem %s0, %s147
      %p149 = pneg %p35
      %p150 = pneg %p32
      %p151 = pneg %p56
      %p152 = pneg %p53
      %p153 = pneg %p77
      %p154 = pneg %p74
      %p155 = pneg %p103
      %p156 = pneg %p100
      %s157 = smul.u32 32, %s14
      %p158 = scmp.lt.s32.totalorder %s157, 63
      %s159 = scalar_select %p158, %s157, 63
      %s160 = smul.addr %s159, 8
      %s161 = scalar_lea.vmem %s3, %s160
      %s162 = smul.u32 32, %s14
      %p163 = scmp.lt.s32.totalorder %s162, 63
      %s164 = scalar_select %p163, %s162, 63
      %s165 = smul.addr %s164, 8
      %s166 = scalar_lea.vmem %s0, %s165
      %s167 = smul.u32 32, %s14
      %s168 = smul.u32 32, %s14
      %p169 = scmp.lt.s32.totalorder %s168, 63
      %s170 = scalar_select %p169, %s168, 63
      %s171 = smul.addr %s170, 8
      %s172 = scalar_lea.vmem %s3, %s171
      %s173 = smul.u32 32, %s14
      %v174 = vld [vmem:[%s166] sm:$0xff]
      %v175 = vld [vmem:[%s166 + $0x8] sm:$0xff]
      %v176 = vld [vmem:[%s166 + $0x10] sm:$0xff]
      %v177 = vld [vmem:[%s166 + $0x18] sm:$0xff]
      %v178 = vld [vmem:[%s166 + $0x20] sm:$0xff]
      %v179 = vld [vmem:[%s166 + $0x28] sm:$0xff]
      %v180 = vld [vmem:[%s166 + $0x30] sm:$0xff]
      %v181 = vld [vmem:[%s166 + $0x38] sm:$0xff]
      %v182 = vld [vmem:[%s166 + $0x40] sm:$0xff]
      %v183 = vld [vmem:[%s166 + $0x48] sm:$0xff]
      %v184 = vld [vmem:[%s166 + $0x50] sm:$0xff]
      %v185 = vld [vmem:[%s166 + $0x58] sm:$0xff]
      %v186 = vld [vmem:[%s166 + $0x60] sm:$0xff]
      %v187 = vld [vmem:[%s166 + $0x68] sm:$0xff]
      %v188 = vld [vmem:[%s166 + $0x70] sm:$0xff]
      %v189 = vld [vmem:[%s166 + $0x78] sm:$0xff]
      %v190 = vld [vmem:[%s166 + $0x80] sm:$0xff]
      %v191 = vld [vmem:[%s166 + $0x88] sm:$0xff]
      %v192 = vld [vmem:[%s166 + $0x90] sm:$0xff]
      %v193 = vld [vmem:[%s166 + $0x98] sm:$0xff]
      %v194 = vld [vmem:[%s166 + $0xa0] sm:$0xff]
      %v195 = vld [vmem:[%s166 + $0xa8] sm:$0xff]
      %v196 = vld [vmem:[%s166 + $0xb0] sm:$0xff]
      %v197 = vld [vmem:[%s166 + $0xb8] sm:$0xff]
      %v198 = vld [vmem:[%s166 + $0xc0] sm:$0xff]
      %v199 = vld [vmem:[%s166 + $0xc8] sm:$0xff]
      %v200 = vld [vmem:[%s166 + $0xd0] sm:$0xff]
      %v201 = vld [vmem:[%s166 + $0xd8] sm:$0xff]
      %v202 = vld [vmem:[%s166 + $0xe0] sm:$0xff]
      %v203 = vld [vmem:[%s166 + $0xe8] sm:$0xff]
      %v204 = vld [vmem:[%s166 + $0xf0] sm:$0xff]
      %v205 = vld [vmem:[%s166 + $0xf8] sm:$0xff]
      %v206 = vld [vmem:[%s1] sm:$0x1]
      %v208 = vlaneseq
      %v209 = vshrl.u32 %v208, 7
      %v210 = vsub.s32 0, %v209
      %v211 = vrot.slane %v206, %v210
      %v213 = vmul.f32 %v174, %v211
      %v214 = vmul.f32 %v175, %v211
      %v215 = vmul.f32 %v176, %v211
      %v216 = vmul.f32 %v177, %v211
      %v217 = vmul.f32 %v178, %v211
      %v218 = vmul.f32 %v179, %v211
      %v219 = vmul.f32 %v180, %v211
      %v220 = vmul.f32 %v181, %v211
      %v221 = vmul.f32 %v182, %v211
      %v222 = vmul.f32 %v183, %v211
      %v223 = vmul.f32 %v184, %v211
      %v224 = vmul.f32 %v185, %v211
      %v225 = vmul.f32 %v186, %v211
      %v226 = vmul.f32 %v187, %v211
      %v227 = vmul.f32 %v188, %v211
      %v228 = vmul.f32 %v189, %v211
      %v229 = vmul.f32 %v190, %v211
      %v230 = vmul.f32 %v191, %v211
      %v231 = vmul.f32 %v192, %v211
      %v232 = vmul.f32 %v193, %v211
      %v233 = vmul.f32 %v194, %v211
      %v234 = vmul.f32 %v195, %v211
      %v235 = vmul.f32 %v196, %v211
      %v236 = vmul.f32 %v197, %v211
      %v237 = vmul.f32 %v198, %v211
      %v238 = vmul.f32 %v199, %v211
      %v239 = vmul.f32 %v200, %v211
      %v240 = vmul.f32 %v201, %v211
      %v241 = vmul.f32 %v202, %v211
      %v242 = vmul.f32 %v203, %v211
      %v243 = vmul.f32 %v204, %v211
      %v244 = vmul.f32 %v205, %v211
      %v245 = vld [vmem:[%s2] sm:$0x1]
      %v247 = vlaneseq
      %v248 = vshrl.u32 %v247, 7
      %v249 = vsub.s32 0, %v248
      %v250 = vrot.slane %v245, %v249
      %v252 = vadd.f32 %v213, %v250
      %v253 = vadd.f32 %v214, %v250
      %v254 = vadd.f32 %v215, %v250
      %v255 = vadd.f32 %v216, %v250
      %v256 = vadd.f32 %v217, %v250
      %v257 = vadd.f32 %v218, %v250
      %v258 = vadd.f32 %v219, %v250
      %v259 = vadd.f32 %v220, %v250
      %v260 = vadd.f32 %v221, %v250
      %v261 = vadd.f32 %v222, %v250
      %v262 = vadd.f32 %v223, %v250
      %v263 = vadd.f32 %v224, %v250
      %v264 = vadd.f32 %v225, %v250
      %v265 = vadd.f32 %v226, %v250
      %v266 = vadd.f32 %v227, %v250
      %v267 = vadd.f32 %v228, %v250
      %v268 = vadd.f32 %v229, %v250
      %v269 = vadd.f32 %v230, %v250
      %v270 = vadd.f32 %v231, %v250
      %v271 = vadd.f32 %v232, %v250
      %v272 = vadd.f32 %v233, %v250
      %v273 = vadd.f32 %v234, %v250
      %v274 = vadd.f32 %v235, %v250
      %v275 = vadd.f32 %v236, %v250
      %v276 = vadd.f32 %v237, %v250
      %v277 = vadd.f32 %v238, %v250
      %v278 = vadd.f32 %v239, %v250
      %v279 = vadd.f32 %v240, %v250
      %v280 = vadd.f32 %v241, %v250
      %v281 = vadd.f32 %v242, %v250
      %v282 = vadd.f32 %v243, %v250
      %v283 = vadd.f32 %v244, %v250
      %v284 = vmax.f32 %v252, 0.0
      %v285 = vmax.f32 %v253, 0.0
      %v286 = vmax.f32 %v254, 0.0
      %v287 = vmax.f32 %v255, 0.0
      %v288 = vmax.f32 %v256, 0.0
      %v289 = vmax.f32 %v257, 0.0
      %v290 = vmax.f32 %v258, 0.0
      %v291 = vmax.f32 %v259, 0.0
      %v292 = vmax.f32 %v260, 0.0
      %v293 = vmax.f32 %v261, 0.0
      %v294 = vmax.f32 %v262, 0.0
      %v295 = vmax.f32 %v263, 0.0
      %v296 = vmax.f32 %v264, 0.0
      %v297 = vmax.f32 %v265, 0.0
      %v298 = vmax.f32 %v266, 0.0
      %v299 = vmax.f32 %v267, 0.0
      %v300 = vmax.f32 %v268, 0.0
      %v301 = vmax.f32 %v269, 0.0
      %v302 = vmax.f32 %v270, 0.0
      %v303 = vmax.f32 %v271, 0.0
      %v304 = vmax.f32 %v272, 0.0
      %v305 = vmax.f32 %v273, 0.0
      %v306 = vmax.f32 %v274, 0.0
      %v307 = vmax.f32 %v275, 0.0
      %v308 = vmax.f32 %v276, 0.0
      %v309 = vmax.f32 %v277, 0.0
      %v310 = vmax.f32 %v278, 0.0
      %v311 = vmax.f32 %v279, 0.0
      %v312 = vmax.f32 %v280, 0.0
      %v313 = vmax.f32 %v281, 0.0
      %v314 = vmax.f32 %v282, 0.0
      %v315 = vmax.f32 %v283, 0.0
      %316 = vst [vmem:[%s172] sm:$0xff] %v284
      %317 = vst [vmem:[%s172 + $0x8] sm:$0xff] %v285
      %318 = vst [vmem:[%s172 + $0x10] sm:$0xff] %v286
      %319 = vst [vmem:[%s172 + $0x18] sm:$0xff] %v287
      %320 = vst [vmem:[%s172 + $0x20] sm:$0xff] %v288
      %321 = vst [vmem:[%s172 + $0x28] sm:$0xff] %v289
      %322 = vst [vmem:[%s172 + $0x30] sm:$0xff] %v290
      %323 = vst [vmem:[%s172 + $0x38] sm:$0xff] %v291
      %324 = vst [vmem:[%s172 + $0x40] sm:$0xff] %v292
      %325 = vst [vmem:[%s172 + $0x48] sm:$0xff] %v293
      %326 = vst [vmem:[%s172 + $0x50] sm:$0xff] %v294
      %327 = vst [vmem:[%s172 + $0x58] sm:$0xff] %v295
      %328 = vst [vmem:[%s172 + $0x60] sm:$0xff] %v296
      %329 = vst [vmem:[%s172 + $0x68] sm:$0xff] %v297
      %330 = vst [vmem:[%s172 + $0x70] sm:$0xff] %v298
      %331 = vst [vmem:[%s172 + $0x78] sm:$0xff] %v299
      %332 = vst [vmem:[%s172 + $0x80] sm:$0xff] %v300
      %333 = vst [vmem:[%s172 + $0x88] sm:$0xff] %v301
      %334 = vst [vmem:[%s172 + $0x90] sm:$0xff] %v302
      %335 = vst [vmem:[%s172 + $0x98] sm:$0xff] %v303
      %336 = vst [vmem:[%s172 + $0xa0] sm:$0xff] %v304
      %337 = vst [vmem:[%s172 + $0xa8] sm:$0xff] %v305
      %338 = vst [vmem:[%s172 + $0xb0] sm:$0xff] %v306
      %339 = vst [vmem:[%s172 + $0xb8] sm:$0xff] %v307
      %340 = vst [vmem:[%s172 + $0xc0] sm:$0xff] %v308
      %341 = vst [vmem:[%s172 + $0xc8] sm:$0xff] %v309
      %342 = vst [vmem:[%s172 + $0xd0] sm:$0xff] %v310
      %343 = vst [vmem:[%s172 + $0xd8] sm:$0xff] %v311
      %344 = vst [vmem:[%s172 + $0xe0] sm:$0xff] %v312
      %345 = vst [vmem:[%s172 + $0xe8] sm:$0xff] %v313
      %346 = vst [vmem:[%s172 + $0xf0] sm:$0xff] %v314
      %347 = vst [vmem:[%s172 + $0xf8] sm:$0xff] %v315
      %s348 = smul.u32 32, %s14
      %p349 = scmp.lt.s32.totalorder %s348, 63
      %s350 = scalar_select %p349, %s348, 63
      %s351 = smul.addr %s350, 8
      %s352 = scalar_lea.vmem %s3, %s351
      // Predicated region
      $region33: #{conv_bn_relu.3} parent=31 // pred_check
        %p353 = pneg %p100
      $region34: #{conv_bn_relu.3} parent=31 // pred_check_branch
        %355 = sbr.rel (%p353) target = $region36
      $region35: #{conv_bn_relu.3} parent=31 // pred_region
        %s356 = smul.u32 32, %s14
      $region36: #{conv_bn_relu.3} parent=31 // pred_fallthru
        _
    $region32: #{conv_bn_relu.3} parent=5 // pred_fallthru
      _
    %p357 = scmp.le.s32.totalorder 2, %s9
    // Predicated region
    $region37: #{conv_bn_relu.3} parent=5 // pred_check
      %p358 = pneg %p357
    $region38: #{conv_bn_relu.3} parent=5 // pred_check_branch
      %360 = sbr.rel (%p358) target = $region40
    $region39: #{conv_bn_relu.3} parent=5 // pred_region
      %s361 = ssub.s32 %s9, 2
      // Predicated region
      $region41: #{conv_bn_relu.3} parent=39 // pred_check
        %p362 = pneg %p106
      $region42: #{conv_bn_relu.3} parent=39 // pred_check_branch
        %364 = sbr.rel (%p362) target = $region44
      $region43: #{conv_bn_relu.3} parent=39 // pred_region
        %s365 = smul.u32 32, %s15
        %p366 = scmp.lt.s32.totalorder %s365, 63
        %s367 = scalar_select %p366, %s365, 63
        %s368 = smul.addr %s367, 8
        %s369 = scalar_lea.vmem %s3, %s368
      $region44: #{conv_bn_relu.3} parent=39 // pred_fallthru
        _
    $region40: #{conv_bn_relu.3} parent=5 // pred_fallthru
      _
  $region6: #{conv_bn_relu.3} parent=0 // loop_footer
    %s13 = sadd.s32 1, %s9
  $region7: #{conv_bn_relu.3} parent=0 // loop_footer_branch
    %8 = sbr.rel target = $region3
  $region8: #{conv_bn_relu.3} parent=0 // loop_exit
    _

</llo_original>
